<compile_context>
chip_gen: v7x
topology: tpu7x:2x2x1
jax: 0.10.0
libtpu: 0.0.40
codegen_flags: <defaults>
</compile_context>

<pallas_src>
import functools

import jax
import jax.numpy as jnp
from jax.experimental import pallas as pl
from jax.experimental.pallas import tpu as pltpu

_LANE = 128
_SUBLANE = 8


def _round_up(x, m):
    return -(-x // m) * m


def _policy_kernel(x_ref, w1_ref, b1_ref, w2_ref, b2_ref, o_ref):
    x = x_ref[...]                      # (TB, D_in)   f32 or bf16
    w1 = w1_ref[...]                    # (D_in, H)    pre-transposed
    b1 = b1_ref[...]                    # (1, H)       f32
    w2 = w2_ref[...]                    # (H, Ap)
    b2 = b2_ref[...]                    # (1, Ap)      f32, -1e30 in padded action lanes

    # fc1 + relu (f32 accumulation on the MXU, bias add in f32)
    h = jnp.dot(x, w1, preferred_element_type=jnp.float32) + b1
    h = jnp.maximum(h, 0.0).astype(w2.dtype)

    # fc2: padded action lanes pick up -1e30 via b2 -> exp underflows to exactly 0
    logits = jnp.dot(h, w2, preferred_element_type=jnp.float32) + b2

    # numerically stable softmax over the lane (action) axis, all f32
    m = jnp.max(logits, axis=-1, keepdims=True)
    e = jnp.exp(logits - m)
    denom = jnp.sum(e, axis=-1, keepdims=True)
    o_ref[...] = (e / denom).astype(o_ref.dtype)


def prepare_params(w1, b1, w2, b2, param_dtype=jnp.float32):
    """One-time layout glue: PyTorch (out,in) weights -> (in, out) kernel layout.

    * hidden dim rounded only to a sublane multiple (16 -> 16)
    * action dim padded to 128 lanes (lane-dense output store); padded action
      biases are -1e30 so those lanes contribute nothing to the softmax.
    * weights in `param_dtype` (bf16 halves the DMA stream on v6e/v7x);
      biases stay f32.
    """
    hidden, d_in = w1.shape
    n_actions = w2.shape[0]
    hp = _round_up(hidden, _SUBLANE)
    ap = _round_up(n_actions, _LANE)

    w1_p = jnp.zeros((d_in, hp), param_dtype).at[:, :hidden].set(w1.T.astype(param_dtype))
    b1_p = jnp.zeros((1, hp), jnp.float32).at[:, :hidden].set(b1.astype(jnp.float32))
    w2_p = jnp.zeros((hp, ap), param_dtype).at[:hidden, :n_actions].set(w2.T.astype(param_dtype))
    b2_p = jnp.full((1, ap), -1e30, jnp.float32).at[:, :n_actions].set(b2.astype(jnp.float32))
    return w1_p, b1_p, w2_p, b2_p


@functools.partial(jax.jit, static_argnames=("n_actions", "batch_tile", "slice_output"))
def policy_forward(state, w1_p, b1_p, w2_p, b2_p, *,
                   n_actions=4, batch_tile=512, slice_output=True):
    """state: (input_dims,) or (B, input_dims).

    slice_output=True  -> (B, n_actions) probs (module semantics; extra slice op)
    slice_output=False -> (B, 128) probs with padded action lanes exactly 0
                          (fast rollout path; safe for Categorical / log_prob).
    """
    x = jnp.asarray(state)
    if x.ndim == 1:
        x = x[None, :]                                  # torch .unsqueeze(0)
    x = x.astype(w1_p.dtype)                            # match weight stream (f32/bf16)
    b, d_in = x.shape
    hp = w1_p.shape[1]
    ap = w2_p.shape[1]

    # Tile selection: >=2 grid steps when possible (engages both v7x TCs via
    # "parallel"), tiles big enough to amortize the ~0.35us/step overhead,
    # capped at batch_tile.  No wrapper pad: Pallas masks the last partial block.
    if b <= _SUBLANE:
        tb = b                                          # tiny batch: full-array block
    else:
        tb = min(batch_tile, _round_up(pl.cdiv(b, 2), _SUBLANE))
    grid = (pl.cdiv(b, tb),)

    out = pl.pallas_call(
        _policy_kernel,
        out_shape=jax.ShapeDtypeStruct((b, ap), jnp.float32),
        grid=grid,
        in_specs=[
            pl.BlockSpec((tb, d_in), lambda i: (i, 0)),   # activations: tiled over batch
            pl.BlockSpec((d_in, hp), lambda i: (0, 0)),   # params resident across grid
            pl.BlockSpec((1, hp), lambda i: (0, 0)),
            pl.BlockSpec((hp, ap), lambda i: (0, 0)),
            pl.BlockSpec((1, ap), lambda i: (0, 0)),
        ],
        out_specs=pl.BlockSpec((tb, ap), lambda i: (i, 0)),  # lane-dense (ap % 128 == 0)
        compiler_params=pltpu.CompilerParams(
            dimension_semantics=("parallel",),               # v7x: batch split over 2 TCs
        ),
    )(x, w1_p, b1_p, w2_p, b2_p)

    if slice_output:
        return out[:, :n_actions]
    return out


def _init_params(key, input_dims=4, hidden_dim=16, n_actions=4):
    """Deterministic init mimicking nn.Linear's uniform(-1/sqrt(fan_in), 1/sqrt(fan_in))."""
    k1, k2, k3, k4 = jax.random.split(key, 4)
    lim1 = 1.0 / jnp.sqrt(jnp.float32(input_dims))
    lim2 = 1.0 / jnp.sqrt(jnp.float32(hidden_dim))
    w1 = jax.random.uniform(k1, (hidden_dim, input_dims), jnp.float32, -lim1, lim1)
    b1 = jax.random.uniform(k2, (hidden_dim,), jnp.float32, -lim1, lim1)
    w2 = jax.random.uniform(k3, (n_actions, hidden_dim), jnp.float32, -lim2, lim2)
    b2 = jax.random.uniform(k4, (n_actions,), jnp.float32, -lim2, lim2)
    return w1, b1, w2, b2


def _reference(x, w1, b1, w2, b2):
    h = jnp.maximum(x @ w1.T + b1, 0.0)
    return jax.nn.softmax(h @ w2.T + b2, axis=-1)


if __name__ == "__main__":
    key = jax.random.PRNGKey(0)
    k_params, k_state, k_batch = jax.random.split(key, 3)

    input_dims, hidden_dim, n_actions = 4, 16, 4
    w1, b1, w2, b2 = _init_params(k_params, input_dims, hidden_dim, n_actions)

    # ---------- f32 parameter stream (v5e-safe, tight tolerance) ----------
    params_f32 = prepare_params(w1, b1, w2, b2, param_dtype=jnp.float32)

    # 1) Module semantics: single CartPole observation, forward unsqueezes to (1, 4).
    state = jax.random.normal(k_state, (input_dims,), jnp.float32)
    probs1 = jax.block_until_ready(
        policy_forward(state, *params_f32, n_actions=n_actions))
    ref1 = _reference(state[None, :], w1, b1, w2, b2)
    assert probs1.shape == (1, n_actions)
    assert jnp.allclose(probs1, ref1, atol=2e-3), (probs1, ref1)
    assert jnp.allclose(jnp.sum(probs1, axis=1), 1.0, atol=1e-3)

    # 2) Batched rollout path: 250 states (non-multiple of the tile) in ONE
    #    pallas_call -- exercises the masked final block, no wrapper pad, and
    #    the padded (B, 128) output consumed directly (no post-kernel slice).
    states = jax.random.normal(k_batch, (250, input_dims), jnp.float32)
    probs_pad = jax.block_until_ready(
        policy_forward(states, *params_f32, n_actions=n_actions, slice_output=False))
    ref = _reference(states, w1, b1, w2, b2)
    assert probs_pad.shape == (250, 128)
    assert jnp.allclose(probs_pad[:, :n_actions], ref, atol=2e-3)
    assert bool(jnp.all(probs_pad[:, n_actions:] == 0.0))       # padded actions: exactly 0
    assert jnp.allclose(jnp.sum(probs_pad, axis=1), 1.0, atol=1e-3)

    # ---------- bf16 weight/activation streams (v6e/v7x bandwidth option) ----------
    params_bf16 = prepare_params(w1, b1, w2, b2, param_dtype=jnp.bfloat16)
    probs_bf16 = jax.block_until_ready(
        policy_forward(states, *params_bf16, n_actions=n_actions, slice_output=False))
    assert probs_bf16.shape == (250, 128)
    assert jnp.allclose(probs_bf16[:, :n_actions], ref, atol=1e-2)
    assert bool(jnp.all(probs_bf16[:, n_actions:] == 0.0))
    assert jnp.allclose(jnp.sum(probs_bf16, axis=1), 1.0, atol=2e-2)

    # TODO(synk): Policy.act() Categorical sampling / log_prob stays host/JAX-side
    # (jax.random.categorical on the returned (padded) probs), not part of the kernel.
    print("KERNEL_OK")
</pallas_src>

<mosaic_0001>
module attributes {stable_mosaic.version = 11 : i64} {
  func.func @_policy_kernel(%arg0: i32, %arg1: memref<1x4xf32, #tpu.memory_space<vmem>>, %arg2: memref<4x16xf32, #tpu.memory_space<vmem>>, %arg3: memref<1x16xf32, #tpu.memory_space<vmem>>, %arg4: memref<16x128xf32, #tpu.memory_space<vmem>>, %arg5: memref<1x128xf32, #tpu.memory_space<vmem>>, %arg6: memref<1x128xf32, #tpu.memory_space<vmem>>) attributes {dimension_semantics = [#tpu.dimension_semantics<parallel>], iteration_bounds = array<i64: 1>, scalar_prefetch = 0 : i64, scratch_operands = 0 : i64, tpu.core_type = #tpu.core_type<tc>, window_params = [{transform_indices = @transform_0, window_bounds = array<i64: 1, 4>}, {pipeline_mode = #tpu.pipeline_mode<synchronous>, transform_indices = @transform_1, window_bounds = array<i64: 4, 16>}, {pipeline_mode = #tpu.pipeline_mode<synchronous>, transform_indices = @transform_2, window_bounds = array<i64: 1, 16>}, {pipeline_mode = #tpu.pipeline_mode<synchronous>, transform_indices = @transform_3, window_bounds = array<i64: 16, 128>}, {pipeline_mode = #tpu.pipeline_mode<synchronous>, transform_indices = @transform_4, window_bounds = array<i64: 1, 128>}, {transform_indices = @transform_5, window_bounds = array<i64: 1, 128>}]} {
    %c0 = arith.constant 0 : index
    %c0_0 = arith.constant 0 : index
    %0 = vector.load %arg1[%c0, %c0_0] : memref<1x4xf32, #tpu.memory_space<vmem>>, vector<1x4xf32>
    %c0_1 = arith.constant 0 : index
    %c0_2 = arith.constant 0 : index
    %1 = vector.load %arg2[%c0_1, %c0_2] : memref<4x16xf32, #tpu.memory_space<vmem>>, vector<4x16xf32>
    %c0_3 = arith.constant 0 : index
    %c0_4 = arith.constant 0 : index
    %2 = vector.load %arg3[%c0_3, %c0_4] : memref<1x16xf32, #tpu.memory_space<vmem>>, vector<1x16xf32>
    %c0_5 = arith.constant 0 : index
    %c0_6 = arith.constant 0 : index
    %3 = vector.load %arg4[%c0_5, %c0_6] : memref<16x128xf32, #tpu.memory_space<vmem>>, vector<16x128xf32>
    %c0_7 = arith.constant 0 : index
    %c0_8 = arith.constant 0 : index
    %4 = vector.load %arg5[%c0_7, %c0_8] : memref<1x128xf32, #tpu.memory_space<vmem>>, vector<1x128xf32>
    %cst = arith.constant dense<0.000000e+00> : vector<1x16xf32>
    %5 = tpu.matmul %0, %1, %cst {dimension_numbers = #tpu.dot_dimension_numbers<[1], [0], [0], [1], [0, 0, 1, 1], [], []>} : vector<1x4xf32>, vector<4x16xf32>, vector<1x16xf32> -> vector<1x16xf32>
    %6 = arith.addf %5, %2 : vector<1x16xf32>
    %cst_9 = arith.constant 0.000000e+00 : f32
    %7 = vector.broadcast %cst_9 : f32 to vector<1x16xf32>
    %8 = arith.maximumf %6, %7 : vector<1x16xf32>
    %cst_10 = arith.constant dense<0.000000e+00> : vector<1x128xf32>
    %9 = tpu.matmul %8, %3, %cst_10 {dimension_numbers = #tpu.dot_dimension_numbers<[1], [0], [0], [1], [0, 0, 1, 1], [], []>} : vector<1x16xf32>, vector<16x128xf32>, vector<1x128xf32> -> vector<1x128xf32>
    %10 = arith.addf %9, %4 : vector<1x128xf32>
    %cst_11 = arith.constant dense<0xFF800000> : vector<1xf32>
    %11 = vector.multi_reduction <maximumf>, %10, %cst_11 [1] : vector<1x128xf32> to vector<1xf32>
    %12 = vector.shape_cast %11 : vector<1xf32> to vector<1x1xf32>
    %13 = vector.broadcast %12 : vector<1x1xf32> to vector<1x128xf32>
    %14 = arith.subf %10, %13 : vector<1x128xf32>
    %15 = math.exp %14 : vector<1x128xf32>
    %cst_12 = arith.constant dense<0.000000e+00> : vector<1xf32>
    %16 = vector.multi_reduction <add>, %15, %cst_12 [1] : vector<1x128xf32> to vector<1xf32>
    %17 = vector.shape_cast %16 : vector<1xf32> to vector<1x1xf32>
    %18 = vector.broadcast %17 : vector<1x1xf32> to vector<1x128xf32>
    %19 = arith.divf %15, %18 : vector<1x128xf32>
    %c0_13 = arith.constant 0 : index
    %c0_14 = arith.constant 0 : index
    %20 = vector.load %arg6[%c0_13, %c0_14] : memref<1x128xf32, #tpu.memory_space<vmem>>, vector<1x128xf32>
    tpu.vector_store %arg6[%c0_13, %c0_14], %19 {strides = array<i32>} : memref<1x128xf32, #tpu.memory_space<vmem>>, vector<1x128xf32>,
    return
  }
  func.func @transform_0(%arg0: i32) -> (i32, i32) {
    %c0_i32 = arith.constant 0 : i32
    %c0_i32_0 = arith.constant 0 : i32
    return %arg0, %c0_i32 : i32, i32
  }
  func.func @transform_1(%arg0: i32) -> (i32, i32) {
    %c0_i32 = arith.constant 0 : i32
    %c0_i32_0 = arith.constant 0 : i32
    %c0_i32_1 = arith.constant 0 : i32
    return %c0_i32, %c0_i32_0 : i32, i32
  }
  func.func @transform_2(%arg0: i32) -> (i32, i32) {
    %c0_i32 = arith.constant 0 : i32
    %c0_i32_0 = arith.constant 0 : i32
    %c0_i32_1 = arith.constant 0 : i32
    return %c0_i32, %c0_i32_0 : i32, i32
  }
  func.func @transform_3(%arg0: i32) -> (i32, i32) {
    %c0_i32 = arith.constant 0 : i32
    %c0_i32_0 = arith.constant 0 : i32
    %c0_i32_1 = arith.constant 0 : i32
    return %c0_i32, %c0_i32_0 : i32, i32
  }
  func.func @transform_4(%arg0: i32) -> (i32, i32) {
    %c0_i32 = arith.constant 0 : i32
    %c0_i32_0 = arith.constant 0 : i32
    %c0_i32_1 = arith.constant 0 : i32
    return %c0_i32, %c0_i32_0 : i32, i32
  }
  func.func @transform_5(%arg0: i32) -> (i32, i32) {
    %c0_i32 = arith.constant 0 : i32
    %c0_i32_0 = arith.constant 0 : i32
    return %arg0, %c0_i32 : i32, i32
  }
}

</mosaic_0001>

<llo_original>
// kernel: policy_forward.1
$region0: #{policy_forward.1}
  #allocation0 [shape = 'u32[]', space=smem, size = 0x4, offset = 0x4, fixed_abs, tag = 'smem constant byte address 0x4 - core index']
  #allocation1 [shape = 'u32[144,128]{1,0:T(1,128)}', space=vmem, size = 0x12000, scoped, tag = 'internal scratch']
  %s0 = inlined_call_operand.vmem [shape: f32[1,4], index: 0, kind: input, shape index: {}]
  %s1 = inlined_call_operand.vmem [shape: f32[4,16], index: 1, kind: input, shape index: {}]
  %s2 = inlined_call_operand.vmem [shape: f32[1,16], index: 2, kind: input, shape index: {}]
  %s3 = inlined_call_operand.hbm [shape: f32[16,128], index: 3, kind: input, shape index: {}]
  %s4 = inlined_call_operand.vmem [shape: f32[1,128], index: 4, kind: input, shape index: {}]
  %s5 = inlined_call_operand.hbm [shape: f32[1,128], index: 5, kind: output, shape index: {}]
  %s6 = sld [smem:[#allocation0]]
  $region34: #{policy_forward.1} parent=0
    _
  %s8 = ssub.s32 1, %s6
  %s9 = scalar_select 0, %s8, %s6
  $region1: #{policy_forward.1} parent=0
    #allocation2 [shape = 'u8[8192]{0}', space=vmem, size = 0x2000, scoped, tag = 'input window, operand 3, single buffered']
    #allocation3 [shape = 's32[1]{0}', space=sflag, size = 0x4, scoped, tag = 'scoped memory for policy_forward.1']
    #allocation4 [shape = 's32[1]{0}', space=sflag, size = 0x4, scoped, tag = 'scoped memory for policy_forward.1']
    #allocation5 [shape = 'u8[512]{0}', space=vmem, size = 0x400, scoped, tag = 'output window, operand 0, single buffered']
    %10 = vsyncpa [#allocation3], 0
    %11 = vsyncpa [#allocation4], 0
    // Predicated region
    $region2: #{policy_forward.1} parent=1 // pred_check
      _
    $region3: #{policy_forward.1} parent=1 // pred_check_branch
      %13 = sbr.rel (0) target = $region5
    $region4: #{policy_forward.1} parent=1 // pred_region
      _
    $region5: #{policy_forward.1} parent=1 // pred_fallthru
      _
    // Predicated region
    $region6: #{policy_forward.1} parent=1 // pred_check
      _
    $region7: #{policy_forward.1} parent=1 // pred_check_branch
      %15 = sbr.rel (0) target = $region9
    $region8: #{policy_forward.1} parent=1 // pred_region
      _
    $region9: #{policy_forward.1} parent=1 // pred_fallthru
      _
    // Predicated region
    $region10: #{policy_forward.1} parent=1 // pred_check
      _
    $region11: #{policy_forward.1} parent=1 // pred_check_branch
      %17 = sbr.rel (0) target = $region13
    $region12: #{policy_forward.1} parent=1 // pred_region
      _
    $region13: #{policy_forward.1} parent=1 // pred_fallthru
      _
    // Predicated region
    $region14: #{policy_forward.1} parent=1 // pred_check
      _
    $region15: #{policy_forward.1} parent=1 // pred_check_branch
      %19 = sbr.rel (0) target = $region17
    $region16: #{policy_forward.1} parent=1 // pred_region
      %s21 = ssub.s32 256, 256
      %22 = vsyncadd [#allocation3], %s21
      %s23 = sshll.u32 [#allocation2], 4
      %s24 = int_to_ptr.vmem [resolvable:$true] %s23
      %29 = dma.hbm_to_vmem [thread:$0]  %s3, 256, %s24, [#allocation3], 128, 128, 8
    $region17: #{policy_forward.1} parent=1 // pred_fallthru
      _
    // Predicated region
    $region18: #{policy_forward.1} parent=1 // pred_check
      _
    $region19: #{policy_forward.1} parent=1 // pred_check_branch
      %31 = sbr.rel (0) target = $region21
    $region20: #{policy_forward.1} parent=1 // pred_region
      _
    $region21: #{policy_forward.1} parent=1 // pred_fallthru
      _
    // Predicated region
    $region22: #{policy_forward.1} parent=1 // pred_check
      _
    $region23: #{policy_forward.1} parent=1 // pred_check_branch
      %33 = sbr.rel (0) target = $region25
    $region24: #{policy_forward.1} parent=1 // pred_region
      %34 = dma.done [#allocation3], 256
    $region25: #{policy_forward.1} parent=1 // pred_fallthru
      _
    %v35 = vld [vmem:[%s0] sm:$0x1]
    %v36 = vld [vmem:[%s1] sm:$0xf]
    %v37 = vld [vmem:[%s2] sm:$0x1]
    %v38 = vld [vmem:[#allocation2] sm:$0xff]
    %v39 = vld [vmem:[#allocation2 + $0x8] sm:$0xff]
    %v40 = vld [vmem:[%s4] sm:$0x1]
    %vm41 = vcmask 31744
    %v43 = vsel %vm41, %v35, 0
    %vm45 = vcmask 1043456
    %v47 = vsel %vm45, %v36, 0
    %49 = vmatprep.subr.mxu0 0.0
    %50 = vmatpush1.msra.mxu0 %v47
    %51 = vmatprep.subr.mxu0 0.0
    %52 = vmatpush1.msra.mxu0 0.0
    %53 = vmatprep.subr.mxu0 0.0
    %54 = vmatpush1.msra.mxu0 0.0
    %55 = vmatprep.subr.mxu0 0.0
    %56 = vmatpush1.msra.mxu0 0.0
    %57 = vmatprep.subr.mxu0 0.0
    %58 = vmatpush1.msra.mxu0 0.0
    %59 = vmatprep.subr.mxu0 0.0
    %60 = vmatpush1.msra.mxu0 0.0
    %61 = vmatprep.subr.mxu0 0.0
    %62 = vmatpush1.msra.mxu0 0.0
    %63 = vmatprep.subr.mxu0 0.0
    %64 = vmatpush1.msra.mxu0 0.0
    %65 = vmatprep.subr.mxu0 0.0
    %66 = vmatpush1.msra.mxu0 0.0
    %67 = vmatprep.subr.mxu0 0.0
    %68 = vmatpush1.msra.mxu0 0.0
    %69 = vmatprep.subr.mxu0 0.0
    %70 = vmatpush1.msra.mxu0 0.0
    %71 = vmatprep.subr.mxu0 0.0
    %72 = vmatpush1.msra.mxu0 0.0
    %73 = vmatprep.subr.mxu0 0.0
    %74 = vmatpush1.msra.mxu0 0.0
    %75 = vmatprep.subr.mxu0 0.0
    %76 = vmatpush1.msra.mxu0 0.0
    %77 = vmatprep.subr.mxu0 0.0
    %78 = vmatpush1.msra.mxu0 0.0
    %79 = vmatprep.subr.mxu0 0.0
    %80 = vmatpush1.msra.mxu0 0.0
    %81 = vmatprep.subr.mxu0 0.0
    %82 = vmatpush1.msra.mxu0 0.0
    %83 = vmatprep.subr.mxu0 0.0
    %84 = vmatpush1.msra.mxu0 0.0
    %85 = vmatprep.subr.mxu0 0.0
    %86 = vmatpush1.msra.mxu0 0.0
    %87 = vmatprep.subr.mxu0 0.0
    %88 = vmatpush1.msra.mxu0 0.0
    %89 = vmatprep.subr.mxu0 0.0
    %90 = vmatpush1.msra.mxu0 0.0
    %91 = vmatprep.subr.mxu0 0.0
    %92 = vmatpush1.msra.mxu0 0.0
    %93 = vmatprep.subr.mxu0 0.0
    %94 = vmatpush1.msra.mxu0 0.0
    %95 = vmatprep.subr.mxu0 0.0
    %96 = vmatpush1.msra.mxu0 0.0
    %97 = vmatprep.subr.mxu0 0.0
    %98 = vmatpush1.msra.mxu0 0.0
    %99 = vmatprep.subr.mxu0 0.0
    %100 = vmatpush1.msra.mxu0 0.0
    %101 = vmatprep.subr.mxu0 0.0
    %102 = vmatpush1.msra.mxu0 0.0
    %103 = vmatprep.subr.mxu0 0.0
    %104 = vmatpush1.msra.mxu0 0.0
    %105 = vmatprep.subr.mxu0 0.0
    %106 = vmatpush1.msra.mxu0 0.0
    %107 = vmatprep.subr.mxu0 0.0
    %108 = vmatpush1.msra.mxu0 0.0
    %109 = vmatprep.subr.mxu0 0.0
    %110 = vmatpush1.msra.mxu0 0.0
    %111 = vmatprep.subr.mxu0 0.0
    %112 = vmatpush1.msra.mxu0 0.0
    %113 = vmatprep.mubr.f32.mxu0 0.0
    %114 = vmatmul.mubr.f32.gmra.mrb[0].mxu0 %v43
    %v115 = vpop.f32.mrb[0].mxu0
    %v116 = vadd.f32 %v37, %v115
    %v117 = vpop.f32.mrb[0].mxu0
    %118 = vdwg.mxu0
    %v119 = vmax.f32 %v116, 0.0
    %vm120 = vcmask 130048
    %v122 = vsel %vm120, %v119, 0
    %124 = vmatprep.subr.mxu0 0.0
    %125 = vmatpush1.msra.mxu0 %v38
    %126 = vmatprep.subr.mxu0 0.0
    %127 = vmatpush1.msra.mxu0 %v39
    %128 = vmatprep.subr.mxu0 0.0
    %129 = vmatpush1.msra.mxu0 0.0
    %130 = vmatprep.subr.mxu0 0.0
    %131 = vmatpush1.msra.mxu0 0.0
    %132 = vmatprep.subr.mxu0 0.0
    %133 = vmatpush1.msra.mxu0 0.0
    %134 = vmatprep.subr.mxu0 0.0
    %135 = vmatpush1.msra.mxu0 0.0
    %136 = vmatprep.subr.mxu0 0.0
    %137 = vmatpush1.msra.mxu0 0.0
    %138 = vmatprep.subr.mxu0 0.0
    %139 = vmatpush1.msra.mxu0 0.0
    %140 = vmatprep.subr.mxu0 0.0
    %141 = vmatpush1.msra.mxu0 0.0
    %142 = vmatprep.subr.mxu0 0.0
    %143 = vmatpush1.msra.mxu0 0.0
    %144 = vmatprep.subr.mxu0 0.0
    %145 = vmatpush1.msra.mxu0 0.0
    %146 = vmatprep.subr.mxu0 0.0
    %147 = vmatpush1.msra.mxu0 0.0
    %148 = vmatprep.subr.mxu0 0.0
    %149 = vmatpush1.msra.mxu0 0.0
    %150 = vmatprep.subr.mxu0 0.0
    %151 = vmatpush1.msra.mxu0 0.0
    %152 = vmatprep.subr.mxu0 0.0
    %153 = vmatpush1.msra.mxu0 0.0
    %154 = vmatprep.subr.mxu0 0.0
    %155 = vmatpush1.msra.mxu0 0.0
    %156 = vmatprep.subr.mxu0 0.0
    %157 = vmatpush1.msra.mxu0 0.0
    %158 = vmatprep.subr.mxu0 0.0
    %159 = vmatpush1.msra.mxu0 0.0
    %160 = vmatprep.subr.mxu0 0.0
    %161 = vmatpush1.msra.mxu0 0.0
    %162 = vmatprep.subr.mxu0 0.0
    %163 = vmatpush1.msra.mxu0 0.0
    %164 = vmatprep.subr.mxu0 0.0
    %165 = vmatpush1.msra.mxu0 0.0
    %166 = vmatprep.subr.mxu0 0.0
    %167 = vmatpush1.msra.mxu0 0.0
    %168 = vmatprep.subr.mxu0 0.0
    %169 = vmatpush1.msra.mxu0 0.0
    %170 = vmatprep.subr.mxu0 0.0
    %171 = vmatpush1.msra.mxu0 0.0
    %172 = vmatprep.subr.mxu0 0.0
    %173 = vmatpush1.msra.mxu0 0.0
    %174 = vmatprep.subr.mxu0 0.0
    %175 = vmatpush1.msra.mxu0 0.0
    %176 = vmatprep.subr.mxu0 0.0
    %177 = vmatpush1.msra.mxu0 0.0
    %178 = vmatprep.subr.mxu0 0.0
    %179 = vmatpush1.msra.mxu0 0.0
    %180 = vmatprep.subr.mxu0 0.0
    %181 = vmatpush1.msra.mxu0 0.0
    %182 = vmatprep.subr.mxu0 0.0
    %183 = vmatpush1.msra.mxu0 0.0
    %184 = vmatprep.subr.mxu0 0.0
    %185 = vmatpush1.msra.mxu0 0.0
    %186 = vmatprep.subr.mxu0 0.0
    %187 = vmatpush1.msra.mxu0 0.0
    %188 = vmatprep.mubr.f32.mxu0 0.0
    %189 = vmatmul.mubr.f32.gmra.mrb[0].mxu0 %v122
    %v190 = vpop.f32.mrb[0].mxu0
    %v191 = vadd.f32 %v40, %v190
    %v192 = vpop.f32.mrb[0].mxu0
    %193 = vdwg.mxu0
    %vm194 = vcmask 1040384
    %v195 = vsel %vm194, %v191, -inf
    %196 = vmax.xlane.f32.xlu0 %v195
    %v197 = vpop.xlane.xlu0 %196
    %v198 = vsub.f32 %v191, %v197
    %v199 = vmul.f32 %v198, 1.442695
    %v200 = vpow.pop %v199
    %v201 = vsel %vm194, %v200, 0.0
    %202 = vadd.xlane.f32.xlu0 %v201
    %v203 = vpop.xlane.xlu0 %202
    %v204 = vrcp.pop %v203
    %v205 = vmul.f32 %v200, %v204
    %206 = vst [vmem:[#allocation5] sm:$0x1] %v205
    // Predicated region
    $region26: #{policy_forward.1} parent=1 // pred_check
      _
    $region27: #{policy_forward.1} parent=1 // pred_check_branch
      %208 = sbr.rel (0) target = $region29
    $region28: #{policy_forward.1} parent=1 // pred_region
      %s210 = ssub.s32 16, 16
      %211 = vsyncadd [#allocation4], %s210
      %s213 = sshll.u32 [#allocation5], 4
      %s214 = int_to_ptr.vmem [resolvable:$true] %s213
      %216 = dma.vmem_to_hbm [thread:$0]  %s214, 16, %s5, [#allocation4]
    $region29: #{policy_forward.1} parent=1 // pred_fallthru
      _
    // Predicated region
    $region30: #{policy_forward.1} parent=1 // pred_check
      _
    $region31: #{policy_forward.1} parent=1 // pred_check_branch
      %218 = sbr.rel (0) target = $region33
    $region32: #{policy_forward.1} parent=1 // pred_region
      %219 = dma.done [#allocation4], 16
    $region33: #{policy_forward.1} parent=1 // pred_fallthru
      _
    %220 = vsyncpa [#allocation3], 1
    %221 = vsyncpa [#allocation4], 1

</llo_original>
